<compile_context>
chip_gen: v5e
topology: v5e:2x2
jax: 0.10.0
libtpu: 0.0.40
codegen_flags: <defaults>
</compile_context>

<pallas_src>
import jax
import jax.numpy as jnp
from jax.experimental import pallas as pl
from jax.experimental.pallas import tpu as pltpu

EPS = 1e-5      # nn.BatchNorm1d default
LANE = 128      # TPU lane width


def _round_up(n, m=LANE):
    return ((n + m - 1) // m) * m


def _pad_row(v, width):
    v = jnp.asarray(v, jnp.float32).reshape(1, -1)
    return jnp.pad(v, ((0, 0), (0, width - v.shape[1])))


# ---------------------------------------------------------------- kernel -----
def _make_fused_mlp_kernel(dims_pad, slab_rows, batch_norm, matmul_dtype):
    """Build a kernel that closes over the static layer structure.

    Ref order: x_ref, w_0..w_{L-1}, slab_ref, o_ref.
    dims_pad:  per-layer (in_pad, out_pad)
    slab_rows: per-layer dict of static row indices into slab ('gamma','beta','b')
    """
    n_layers = len(dims_pad)

    def kernel(*refs):
        x_ref = refs[0]
        w_refs = refs[1:1 + n_layers]
        slab_ref = refs[1 + n_layers]
        o_ref = refs[-1]

        h = x_ref[...]                        # f32, stays in vregs/VMEM the whole time
        for i in range(n_layers):             # static Python loop: shapes are static
            in_pad, out_pad = dims_pad[i]
            rows = slab_rows[i]
            if i > 0:
                if batch_norm:
                    r = rows["gamma"]
                    gamma = slab_ref[r:r + 1, :in_pad]
                    r = rows["beta"]
                    beta = slab_ref[r:r + 1, :in_pad]
                    # BatchNorm1d (training): batch mean / biased var, folded into
                    # a per-feature scale/shift so the big tensor sees only 2 ops/elem.
                    mean = jnp.mean(h, axis=0, keepdims=True)
                    d = h - mean
                    var = jnp.mean(d * d, axis=0, keepdims=True)
                    scale = gamma * jax.lax.rsqrt(var + EPS)
                    shift = beta - mean * scale
                    h = h * scale + shift     # padded cols: gamma=beta=0 -> stay 0
                h = jnp.maximum(h, 0.0)       # ReLU — VPU filler
                # TODO(synk): nn.Dropout not implemented (default dropout_ratio == 0).
            r = rows["b"]
            b = slab_ref[r:r + 1, :out_pad]
            w = w_refs[i][...]
            h = jnp.dot(h.astype(matmul_dtype), w,
                        preferred_element_type=jnp.float32) + b
        o_ref[...] = h

    return kernel


# ------------------------------------------------------- one-time packing ----
def prepare_mlp_params(params, *, batch_norm=True, matmul_dtype=jnp.float32):
    """Pad + pack parameters ONCE (not per forward).

    params: list of per-layer dicts
       layer 0:   {'w': (in, out), 'b': (1, out)}            (W stored pre-transposed)
       layer i>0: additionally {'gamma': (1, in), 'beta': (1, in)} if batch_norm.

    Returns a dict holding padded weights (in matmul_dtype), one f32 vector slab
    (all biases / gammas / betas), and the static layout metadata for the kernel.
    Padding is mathematically inert: padded W rows/cols, bias, gamma, beta are zero,
    so padded activation columns stay exactly zero through BN / ReLU / matmul.
    """
    n_layers = len(params)
    dims_pad = []
    for p in params:
        fi, fo = p["w"].shape
        dims_pad.append((_round_up(fi), _round_up(fo)))
    slab_width = max(max(d) for d in dims_pad)

    w_padded, slab_rows, rows = [], [], []
    r = 0
    for i, p in enumerate(params):
        fi, fo = p["w"].shape
        pi, po = dims_pad[i]
        w = jnp.zeros((pi, po), jnp.float32).at[:fi, :fo].set(p["w"])
        w_padded.append(w.astype(matmul_dtype))
        row_idx = {}
        if i > 0 and batch_norm:
            row_idx["gamma"] = r; rows.append(_pad_row(p["gamma"], slab_width)); r += 1
            row_idx["beta"] = r; rows.append(_pad_row(p["beta"], slab_width)); r += 1
        row_idx["b"] = r; rows.append(_pad_row(p["b"], slab_width)); r += 1
        slab_rows.append(row_idx)

    slab = jnp.concatenate(rows, axis=0)          # (n_rows, slab_width), f32
    return dict(
        w=w_padded, slab=slab,
        dims_pad=tuple(dims_pad), slab_rows=tuple(slab_rows),
        in_dim=params[0]["w"].shape[0], out_dim=params[-1]["w"].shape[1],
        batch_norm=batch_norm, matmul_dtype=matmul_dtype,
        n_layers=n_layers,
    )


# --------------------------------------------------------------- wrapper -----
def mlp_layers_forward(x, prepared):
    """Fused forward: one pallas_call, activations never leave VMEM between layers."""
    n_layers = prepared["n_layers"]
    dims_pad = prepared["dims_pad"]
    in_pad = dims_pad[0][0]
    out_pad = dims_pad[-1][1]
    batch = x.shape[0]

    # lane-dense input block (zero columns are inert: matching W rows are zero)
    x_pad = jnp.pad(x.astype(jnp.float32), ((0, 0), (0, in_pad - prepared["in_dim"])))

    kernel = _make_fused_mlp_kernel(dims_pad, prepared["slab_rows"],
                                    prepared["batch_norm"], prepared["matmul_dtype"])

    # --- VMEM budget from the actual resident footprint (all inputs + output) ---
    resident = (x_pad.size * x_pad.dtype.itemsize
                + sum(w.size * w.dtype.itemsize for w in prepared["w"])
                + prepared["slab"].size * prepared["slab"].dtype.itemsize
                + batch * out_pad * 4)
    try:
        vmem_cap = int(pltpu.get_tpu_info().vmem_capacity_bytes)
    except Exception:
        vmem_cap = 64 << 20                      # conservative: v7x per-TC VMEM
    vmem_limit = min(max(3 * resident + (2 << 20), 16 << 20), int(vmem_cap * 7 // 8))

    # --- advisory cost hint: this shape is latency/DMA bound, not MXU bound ---
    flops = sum(2 * batch * pi * po for pi, po in dims_pad)
    transcendentals = (sum(dims_pad[i][0] for i in range(1, n_layers))
                       if prepared["batch_norm"] else 0)

    n_inputs = 1 + n_layers + 1                  # x, per-layer W, slab
    out = pl.pallas_call(
        kernel,
        out_shape=jax.ShapeDtypeStruct((batch, out_pad), jnp.float32),
        in_specs=[pl.BlockSpec(memory_space=pltpu.MemorySpace.VMEM)] * n_inputs,
        out_specs=pl.BlockSpec(memory_space=pltpu.MemorySpace.VMEM),
        compiler_params=pltpu.CompilerParams(vmem_limit_bytes=vmem_limit),
        cost_estimate=pl.CostEstimate(flops=flops,
                                      transcendentals=transcendentals,
                                      bytes_accessed=resident),
    )(x_pad, *prepared["w"], prepared["slab"])
    return out[:, :prepared["out_dim"]]


# ----------------------------------------------------------------- init ------
def init_mlp_params(key, h_units, *, batch_norm=True):
    """Deterministic init mimicking PyTorch defaults:
       Linear: U(-1/sqrt(fan_in)) for W and b; BN: gamma=1, beta=0."""
    params = []
    n_layers = len(h_units) - 1
    for i in range(n_layers):
        fan_in, fan_out = h_units[i], h_units[i + 1]
        key, kw, kb = jax.random.split(key, 3)
        bound = 1.0 / jnp.sqrt(fan_in)
        w = jax.random.uniform(kw, (fan_in, fan_out), jnp.float32, -bound, bound)
        b = jax.random.uniform(kb, (1, fan_out), jnp.float32, -bound, bound)
        p = {"w": w, "b": b}
        if i > 0 and batch_norm:
            p["gamma"] = jnp.ones((1, fan_in), jnp.float32)
            p["beta"] = jnp.zeros((1, fan_in), jnp.float32)
        params.append(p)
    return params


# ------------------------------------------------------------- reference -----
def mlp_layers_reference(x, params, *, batch_norm=True):
    n_layers = len(params)
    for i in range(n_layers):
        p = params[i]
        if i > 0:
            if batch_norm:
                mean = jnp.mean(x, axis=0, keepdims=True)
                var = jnp.mean((x - mean) ** 2, axis=0, keepdims=True)
                x = (x - mean) / jnp.sqrt(var + EPS) * p["gamma"] + p["beta"]
            x = jnp.maximum(x, 0.0)
        x = x @ p["w"] + p["b"]
    return x


# ------------------------------------------------------------------ main -----
if __name__ == "__main__":
    # MLPLayers(layers=2, h_units=[16, 32, 8], dropout=0, batch_norm=True)
    layers = 2
    h_units = [16, 32, 8]
    batch = 8

    key = jax.random.PRNGKey(0)
    key, kx = jax.random.split(key)
    x = jax.random.normal(kx, (batch, h_units[0]), jnp.float32)

    params = init_mlp_params(key, h_units, batch_norm=True)

    # f32 path (matches PyTorch semantics exactly)
    prepared = prepare_mlp_params(params, batch_norm=True)
    out = jax.block_until_ready(mlp_layers_forward(x, prepared))
    ref = mlp_layers_reference(x, params, batch_norm=True)
    assert out.shape == (batch, h_units[-1]), out.shape
    assert jnp.allclose(out, ref, atol=1e-4, rtol=1e-4), "f32 mismatch vs JAX reference"

    # bf16-matmul-operand path (v6e/v7x MXU throughput + halved weight bytes);
    # accumulation and all BN/ReLU math remain f32.
    prepared_bf16 = prepare_mlp_params(params, batch_norm=True,
                                       matmul_dtype=jnp.bfloat16)
    out_bf16 = jax.block_until_ready(mlp_layers_forward(x, prepared_bf16))
    assert out_bf16.shape == (batch, h_units[-1])
    assert jnp.allclose(out_bf16, ref, atol=1e-1, rtol=1e-1), "bf16 path too far off"

    # no-BN path (ReLU still fused in-kernel, not JAX glue)
    params_nobn = init_mlp_params(key, h_units, batch_norm=False)
    prepared_nobn = prepare_mlp_params(params_nobn, batch_norm=False)
    out_nobn = jax.block_until_ready(mlp_layers_forward(x, prepared_nobn))
    ref_nobn = mlp_layers_reference(x, params_nobn, batch_norm=False)
    assert jnp.allclose(out_nobn, ref_nobn, atol=1e-4, rtol=1e-4), "no-BN mismatch"

    print("KERNEL_OK")
</pallas_src>

<mosaic_0001>
module attributes {stable_mosaic.version = 11 : i64} {
  func.func @kernel(%arg0: memref<8x128xf32, #tpu.memory_space<vmem>>, %arg1: memref<128x128xf32, #tpu.memory_space<vmem>>, %arg2: memref<128x128xf32, #tpu.memory_space<vmem>>, %arg3: memref<4x128xf32, #tpu.memory_space<vmem>>, %arg4: memref<8x128xf32, #tpu.memory_space<vmem>>) attributes {dimension_semantics = [], scalar_prefetch = 0 : i64, scratch_operands = 0 : i64, tpu.core_type = #tpu.core_type<tc>} {
    %c0 = arith.constant 0 : index
    %c0_0 = arith.constant 0 : index
    %0 = vector.load %arg0[%c0, %c0_0] : memref<8x128xf32, #tpu.memory_space<vmem>>, vector<8x128xf32>
    %c0_1 = arith.constant 0 : index
    %c0_2 = arith.constant 0 : index
    %1 = vector.load %arg3[%c0_1, %c0_2] : memref<4x128xf32, #tpu.memory_space<vmem>>, vector<1x128xf32>
    %c0_3 = arith.constant 0 : index
    %c0_4 = arith.constant 0 : index
    %2 = vector.load %arg1[%c0_3, %c0_4] : memref<128x128xf32, #tpu.memory_space<vmem>>, vector<128x128xf32>
    %cst = arith.constant dense<0.000000e+00> : vector<8x128xf32>
    %3 = tpu.matmul %0, %2, %cst {dimension_numbers = #tpu.dot_dimension_numbers<[1], [0], [0], [1], [0, 0, 1, 1], [], []>} : vector<8x128xf32>, vector<128x128xf32>, vector<8x128xf32> -> vector<8x128xf32>
    %4 = vector.broadcast %1 : vector<1x128xf32> to vector<8x128xf32>
    %5 = arith.addf %3, %4 : vector<8x128xf32>
    %c1 = arith.constant 1 : index
    %c0_5 = arith.constant 0 : index
    %6 = vector.load %arg3[%c1, %c0_5] : memref<4x128xf32, #tpu.memory_space<vmem>>, vector<1x128xf32>
    %c2 = arith.constant 2 : index
    %c0_6 = arith.constant 0 : index
    %7 = vector.load %arg3[%c2, %c0_6] : memref<4x128xf32, #tpu.memory_space<vmem>>, vector<1x128xf32>
    %cst_7 = arith.constant dense<0.000000e+00> : vector<128xf32>
    %8 = vector.multi_reduction <add>, %5, %cst_7 [0] : vector<8x128xf32> to vector<128xf32>
    %9 = vector.shape_cast %8 : vector<128xf32> to vector<1x128xf32>
    %cst_8 = arith.constant 8.000000e+00 : f32
    %10 = vector.broadcast %cst_8 : f32 to vector<1x128xf32>
    %11 = arith.divf %9, %10 : vector<1x128xf32>
    %12 = vector.broadcast %11 : vector<1x128xf32> to vector<8x128xf32>
    %13 = arith.subf %5, %12 : vector<8x128xf32>
    %14 = arith.mulf %13, %13 : vector<8x128xf32>
    %cst_9 = arith.constant dense<0.000000e+00> : vector<128xf32>
    %15 = vector.multi_reduction <add>, %14, %cst_9 [0] : vector<8x128xf32> to vector<128xf32>
    %16 = vector.shape_cast %15 : vector<128xf32> to vector<1x128xf32>
    %cst_10 = arith.constant 8.000000e+00 : f32
    %17 = vector.broadcast %cst_10 : f32 to vector<1x128xf32>
    %18 = arith.divf %16, %17 : vector<1x128xf32>
    %cst_11 = arith.constant 9.99999974E-6 : f32
    %19 = vector.broadcast %cst_11 : f32 to vector<1x128xf32>
    %20 = arith.addf %18, %19 : vector<1x128xf32>
    %21 = math.rsqrt %20 : vector<1x128xf32>
    %22 = arith.mulf %6, %21 : vector<1x128xf32>
    %23 = arith.mulf %11, %22 : vector<1x128xf32>
    %24 = arith.subf %7, %23 : vector<1x128xf32>
    %25 = vector.broadcast %22 : vector<1x128xf32> to vector<8x128xf32>
    %26 = arith.mulf %5, %25 : vector<8x128xf32>
    %27 = vector.broadcast %24 : vector<1x128xf32> to vector<8x128xf32>
    %28 = arith.addf %26, %27 : vector<8x128xf32>
    %cst_12 = arith.constant 0.000000e+00 : f32
    %29 = vector.broadcast %cst_12 : f32 to vector<8x128xf32>
    %30 = arith.maximumf %28, %29 : vector<8x128xf32>
    %c3 = arith.constant 3 : index
    %c0_13 = arith.constant 0 : index
    %31 = vector.load %arg3[%c3, %c0_13] : memref<4x128xf32, #tpu.memory_space<vmem>>, vector<1x128xf32>
    %c0_14 = arith.constant 0 : index
    %c0_15 = arith.constant 0 : index
    %32 = vector.load %arg2[%c0_14, %c0_15] : memref<128x128xf32, #tpu.memory_space<vmem>>, vector<128x128xf32>
    %cst_16 = arith.constant dense<0.000000e+00> : vector<8x128xf32>
    %33 = tpu.matmul %30, %32, %cst_16 {dimension_numbers = #tpu.dot_dimension_numbers<[1], [0], [0], [1], [0, 0, 1, 1], [], []>} : vector<8x128xf32>, vector<128x128xf32>, vector<8x128xf32> -> vector<8x128xf32>
    %34 = vector.broadcast %31 : vector<1x128xf32> to vector<8x128xf32>
    %35 = arith.addf %33, %34 : vector<8x128xf32>
    %c0_17 = arith.constant 0 : index
    %c0_18 = arith.constant 0 : index
    %36 = vector.load %arg4[%c0_17, %c0_18] : memref<8x128xf32, #tpu.memory_space<vmem>>, vector<8x128xf32>
    tpu.vector_store %arg4[%c0_17, %c0_18], %35 {strides = array<i32>} : memref<8x128xf32, #tpu.memory_space<vmem>>, vector<8x128xf32>,
    return
  }
}

</mosaic_0001>

<llo_original>
// kernel: tpu_custom_call.1
$region0: #{tpu_custom_call.1}
  #allocation0 [shape = 'u32[]', space=smem, size = 0x4, offset = 0x4, fixed_abs, tag = 'smem constant byte address 0x4 - core index']
  #allocation1 [shape = 'u32[72,128]{1,0:T(1,128)}', space=vmem, size = 0x9000, scoped, tag = 'internal scratch']
  %s0 = inlined_call_operand.hbm [shape: f32[8,128], index: 0, kind: input, shape index: {}]
  %s1 = inlined_call_operand.hbm [shape: f32[128,128], index: 1, kind: input, shape index: {}]
  %s2 = inlined_call_operand.hbm [shape: f32[128,128], index: 2, kind: input, shape index: {}]
  %s3 = inlined_call_operand.hbm [shape: f32[4,128], index: 3, kind: input, shape index: {}]
  %s4 = inlined_call_operand.hbm [shape: f32[8,128], index: 4, kind: output, shape index: {}]
  %s5 = sld [smem:[#allocation0]]
  $region42: #{tpu_custom_call.1} parent=0
    _
  %s7 = ssub.s32 1, %s5
  %s8 = scalar_select 0, %s7, %s5
  $region1: #{tpu_custom_call.1} parent=0
    #allocation2 [shape = 'u8[4096]{0}', space=vmem, size = 0x1000, scoped, tag = 'input window, operand 0, single buffered']
    #allocation3 [shape = 's32[1]{0}', space=sflag, size = 0x4, scoped, tag = 'scoped memory for tpu_custom_call.1']
    #allocation4 [shape = 's32[1]{0}', space=sflag, size = 0x4, scoped, tag = 'scoped memory for tpu_custom_call.1']
    #allocation5 [shape = 'u8[65536]{0}', space=vmem, size = 0x10000, scoped, tag = 'input window, operand 1, single buffered']
    #allocation6 [shape = 's32[1]{0}', space=sflag, size = 0x4, scoped, tag = 'scoped memory for tpu_custom_call.1']
    #allocation7 [shape = 'u8[65536]{0}', space=vmem, size = 0x10000, scoped, tag = 'input window, operand 2, single buffered']
    #allocation8 [shape = 'u8[2048]{0}', space=vmem, size = 0x800, scoped, tag = 'input window, operand 3, single buffered']
    #allocation9 [shape = 's32[1]{0}', space=sflag, size = 0x4, scoped, tag = 'scoped memory for tpu_custom_call.1']
    #allocation10 [shape = 'u8[4096]{0}', space=vmem, size = 0x1000, scoped, tag = 'output window, operand 0, single buffered']
    %9 = vsyncpa [#allocation3], 0
    %10 = vsyncpa [#allocation6], 0
    %11 = vsyncpa [#allocation9], 0
    %12 = vsyncpa [#allocation4], 0
    // Predicated region
    $region2: #{tpu_custom_call.1} parent=1 // pred_check
      _
    $region3: #{tpu_custom_call.1} parent=1 // pred_check_branch
      %14 = sbr.rel (0) target = $region5
    $region4: #{tpu_custom_call.1} parent=1 // pred_region
      %16 = vsyncadd [#allocation3], 0
      %s18 = sshll.u32 %s0, 4
      %s19 = int_to_ptr.hbm [resolvable:$true] %s18
      %s20 = sshll.u32 [#allocation2], 4
      %s21 = int_to_ptr.vmem [resolvable:$true] %s20
      %23 = dma.hbm_to_vmem [thread:$0]  %s19, 128, %s21, [#allocation3]
    $region5: #{tpu_custom_call.1} parent=1 // pred_fallthru
      _
    // Predicated region
    $region6: #{tpu_custom_call.1} parent=1 // pred_check
      _
    $region7: #{tpu_custom_call.1} parent=1 // pred_check_branch
      %25 = sbr.rel (0) target = $region9
    $region8: #{tpu_custom_call.1} parent=1 // pred_region
      %27 = vsyncadd [#allocation6], 0
      %s28 = sshll.u32 %s1, 4
      %s29 = int_to_ptr.hbm [resolvable:$true] %s28
      %s30 = sshll.u32 [#allocation5], 4
      %s31 = int_to_ptr.vmem [resolvable:$true] %s30
      %36 = dma.hbm_to_vmem [thread:$0]  %s29, 2048, %s31, [#allocation6], 128, 128, 8
    $region9: #{tpu_custom_call.1} parent=1 // pred_fallthru
      _
    // Predicated region
    $region10: #{tpu_custom_call.1} parent=1 // pred_check
      _
    $region11: #{tpu_custom_call.1} parent=1 // pred_check_branch
      %38 = sbr.rel (0) target = $region13
    $region12: #{tpu_custom_call.1} parent=1 // pred_region
      %40 = vsyncadd [#allocation6], 0
      %s41 = sshll.u32 %s2, 4
      %s42 = int_to_ptr.hbm [resolvable:$true] %s41
      %s43 = sshll.u32 [#allocation7], 4
      %s44 = int_to_ptr.vmem [resolvable:$true] %s43
      %49 = dma.hbm_to_vmem [thread:$0]  %s42, 2048, %s44, [#allocation6], 128, 128, 8
    $region13: #{tpu_custom_call.1} parent=1 // pred_fallthru
      _
    // Predicated region
    $region14: #{tpu_custom_call.1} parent=1 // pred_check
      _
    $region15: #{tpu_custom_call.1} parent=1 // pred_check_branch
      %51 = sbr.rel (0) target = $region17
    $region16: #{tpu_custom_call.1} parent=1 // pred_region
      %53 = vsyncadd [#allocation9], 0
      %s55 = sshll.u32 %s3, 4
      %s56 = int_to_ptr.hbm [resolvable:$true] %s55
      %s57 = sshll.u32 [#allocation8], 4
      %s58 = int_to_ptr.vmem [resolvable:$true] %s57
      %60 = dma.hbm_to_vmem [thread:$0]  %s56, 64, %s58, [#allocation9]
    $region17: #{tpu_custom_call.1} parent=1 // pred_fallthru
      _
    // Predicated region
    $region18: #{tpu_custom_call.1} parent=1 // pred_check
      _
    $region19: #{tpu_custom_call.1} parent=1 // pred_check_branch
      %62 = sbr.rel (0) target = $region21
    $region20: #{tpu_custom_call.1} parent=1 // pred_region
      %64 = dma.done [#allocation3], 128
    $region21: #{tpu_custom_call.1} parent=1 // pred_fallthru
      _
    // Predicated region
    $region22: #{tpu_custom_call.1} parent=1 // pred_check
      _
    $region23: #{tpu_custom_call.1} parent=1 // pred_check_branch
      %66 = sbr.rel (0) target = $region25
    $region24: #{tpu_custom_call.1} parent=1 // pred_region
      %68 = dma.done [#allocation6], 2048
    $region25: #{tpu_custom_call.1} parent=1 // pred_fallthru
      _
    // Predicated region
    $region26: #{tpu_custom_call.1} parent=1 // pred_check
      _
    $region27: #{tpu_custom_call.1} parent=1 // pred_check_branch
      %70 = sbr.rel (0) target = $region29
    $region28: #{tpu_custom_call.1} parent=1 // pred_region
      %72 = dma.done [#allocation6], 2048
    $region29: #{tpu_custom_call.1} parent=1 // pred_fallthru
      _
    // Predicated region
    $region30: #{tpu_custom_call.1} parent=1 // pred_check
      _
    $region31: #{tpu_custom_call.1} parent=1 // pred_check_branch
      %74 = sbr.rel (0) target = $region33
    $region32: #{tpu_custom_call.1} parent=1 // pred_region
      %76 = dma.done [#allocation9], 64
    $region33: #{tpu_custom_call.1} parent=1 // pred_fallthru
      _
    %v77 = vld [vmem:[#allocation2] sm:$0xff]
    %v78 = vld [vmem:[#allocation8] sm:$0x1]
    %v79 = vld [vmem:[#allocation5] sm:$0xff]
    %v80 = vld [vmem:[#allocation5 + $0x8] sm:$0xff]
    %v81 = vld [vmem:[#allocation5 + $0x10] sm:$0xff]
    %v82 = vld [vmem:[#allocation5 + $0x18] sm:$0xff]
    %v83 = vld [vmem:[#allocation5 + $0x20] sm:$0xff]
    %v84 = vld [vmem:[#allocation5 + $0x28] sm:$0xff]
    %v85 = vld [vmem:[#allocation5 + $0x30] sm:$0xff]
    %v86 = vld [vmem:[#allocation5 + $0x38] sm:$0xff]
    %v87 = vld [vmem:[#allocation5 + $0x40] sm:$0xff]
    %v88 = vld [vmem:[#allocation5 + $0x48] sm:$0xff]
    %v89 = vld [vmem:[#allocation5 + $0x50] sm:$0xff]
    %v90 = vld [vmem:[#allocation5 + $0x58] sm:$0xff]
    %v91 = vld [vmem:[#allocation5 + $0x60] sm:$0xff]
    %v92 = vld [vmem:[#allocation5 + $0x68] sm:$0xff]
    %v93 = vld [vmem:[#allocation5 + $0x70] sm:$0xff]
    %v94 = vld [vmem:[#allocation5 + $0x78] sm:$0xff]
    %v95 = vperm.slane %v78, 0
    %96 = vmatpush.msra.mxu0 %v94
    %97 = vmatpush.msra.mxu0 %v93
    %98 = vmatpush.msra.mxu0 %v92
    %99 = vmatpush.msra.mxu0 %v91
    %100 = vmatpush.msra.mxu0 %v90
    %101 = vmatpush.msra.mxu0 %v89
    %102 = vmatpush.msra.mxu0 %v88
    %103 = vmatpush.msra.mxu0 %v87
    %104 = vmatpush.msra.mxu0 %v86
    %105 = vmatpush.msra.mxu0 %v85
    %106 = vmatpush.msra.mxu0 %v84
    %107 = vmatpush.msra.mxu0 %v83
    %108 = vmatpush.msra.mxu0 %v82
    %109 = vmatpush.msra.mxu0 %v81
    %110 = vmatpush.msra.mxu0 %v80
    %111 = vmatpush.msra.mxu0 %v79
    %112 = vmatmul.f32.gmra.mxu0 %v77
    %v113 = vpop.f32.mrf.mxu0
    %v114 = vadd.f32 %v95, %v113
    %115 = vdwg.mxu0
    %v116 = vld [vmem:[#allocation8 + $0x1] sm:$0x1]
    %v117 = vld [vmem:[#allocation8 + $0x2] sm:$0x1]
    %v118 = vrot.slane %v114, 4
    %v119 = vadd.f32 %v114, %v118
    %v120 = vrot.slane %v119, 2
    %v121 = vadd.f32 %v119, %v120
    %v122 = vrot.slane %v121, 1
    %v123 = vadd.f32 %v121, %v122
    %v124 = vrcp.pop 8.0
    %v125 = vmul.f32 8.0, %v124
    %v126 = vsub.f32 1.0, %v125
    %v127 = vmul.f32 %v124, %v126
    %v128 = vadd.f32 %v124, %v127
    %vm129 = vweird.f32 %v124
    %v130 = vsel %vm129, %v124, %v128
    %v131 = vmul.f32 %v123, %v130
    %v132 = vsub.f32 %v114, %v131
    %v133 = vmul.f32 %v132, %v132
    %v134 = vrot.slane %v133, 4
    %v135 = vadd.f32 %v133, %v134
    %v136 = vrot.slane %v135, 2
    %v137 = vadd.f32 %v135, %v136
    %v138 = vrot.slane %v137, 1
    %v139 = vadd.f32 %v137, %v138
    %v140 = vmul.f32 %v139, %v130
    %v141 = vadd.f32 %v140, 1e-05
    %v142 = vrsqrt.pop %v141
    %v143 = vmul.f32 %v142, %v141
    %v144 = vmul.f32 %v143, %v142
    %v145 = vmul.f32 0.5, %v144
    %v146 = vsub.f32 1.5, %v145
    %v147 = vmul.f32 %v142, %v146
    %vm148 = vweird.f32 %v141
    %vm149 = vweird.f32 %v142
    %vm150 = vmor %vm148, %vm149
    %v151 = vsel %vm150, %v142, %v147
    %v152 = vmul.f32 %v116, %v151
    %v153 = vmul.f32 %v131, %v152
    %v154 = vsub.f32 %v117, %v153
    %v155 = vperm.slane %v152, 0
    %v156 = vmul.f32 %v114, %v155
    %v157 = vperm.slane %v154, 0
    %v158 = vadd.f32 %v156, %v157
    %v159 = vmax.f32 %v158, 0.0
    %v160 = vld [vmem:[#allocation8 + $0x3] sm:$0x1]
    %v161 = vld [vmem:[#allocation7] sm:$0xff]
    %v162 = vld [vmem:[#allocation7 + $0x8] sm:$0xff]
    %v163 = vld [vmem:[#allocation7 + $0x10] sm:$0xff]
    %v164 = vld [vmem:[#allocation7 + $0x18] sm:$0xff]
    %v165 = vld [vmem:[#allocation7 + $0x20] sm:$0xff]
    %v166 = vld [vmem:[#allocation7 + $0x28] sm:$0xff]
    %v167 = vld [vmem:[#allocation7 + $0x30] sm:$0xff]
    %v168 = vld [vmem:[#allocation7 + $0x38] sm:$0xff]
    %v169 = vld [vmem:[#allocation7 + $0x40] sm:$0xff]
    %v170 = vld [vmem:[#allocation7 + $0x48] sm:$0xff]
    %v171 = vld [vmem:[#allocation7 + $0x50] sm:$0xff]
    %v172 = vld [vmem:[#allocation7 + $0x58] sm:$0xff]
    %v173 = vld [vmem:[#allocation7 + $0x60] sm:$0xff]
    %v174 = vld [vmem:[#allocation7 + $0x68] sm:$0xff]
    %v175 = vld [vmem:[#allocation7 + $0x70] sm:$0xff]
    %v176 = vld [vmem:[#allocation7 + $0x78] sm:$0xff]
    %v177 = vperm.slane %v160, 0
    %178 = vmatpush.msra.mxu0 %v176
    %179 = vmatpush.msra.mxu0 %v175
    %180 = vmatpush.msra.mxu0 %v174
    %181 = vmatpush.msra.mxu0 %v173
    %182 = vmatpush.msra.mxu0 %v172
    %183 = vmatpush.msra.mxu0 %v171
    %184 = vmatpush.msra.mxu0 %v170
    %185 = vmatpush.msra.mxu0 %v169
    %186 = vmatpush.msra.mxu0 %v168
    %187 = vmatpush.msra.mxu0 %v167
    %188 = vmatpush.msra.mxu0 %v166
    %189 = vmatpush.msra.mxu0 %v165
    %190 = vmatpush.msra.mxu0 %v164
    %191 = vmatpush.msra.mxu0 %v163
    %192 = vmatpush.msra.mxu0 %v162
    %193 = vmatpush.msra.mxu0 %v161
    %194 = vmatmul.f32.gmra.mxu0 %v159
    %v195 = vpop.f32.mrf.mxu0
    %v196 = vadd.f32 %v177, %v195
    %197 = vdwg.mxu0
    %198 = vst [vmem:[#allocation10] sm:$0xff] %v196
    // Predicated region
    $region34: #{tpu_custom_call.1} parent=1 // pred_check
      _
    $region35: #{tpu_custom_call.1} parent=1 // pred_check_branch
      %200 = sbr.rel (0) target = $region37
    $region36: #{tpu_custom_call.1} parent=1 // pred_region
      %202 = vsyncadd [#allocation4], 0
      %s204 = sshll.u32 [#allocation10], 4
      %s205 = int_to_ptr.vmem [resolvable:$true] %s204
      %s206 = sshll.u32 %s4, 4
      %s207 = int_to_ptr.hbm [resolvable:$true] %s206
      %209 = dma.vmem_to_hbm [thread:$0]  %s205, 128, %s207, [#allocation4]
    $region37: #{tpu_custom_call.1} parent=1 // pred_fallthru
      _
    // Predicated region
    $region38: #{tpu_custom_call.1} parent=1 // pred_check
      _
    $region39: #{tpu_custom_call.1} parent=1 // pred_check_branch
      %211 = sbr.rel (0) target = $region41
    $region40: #{tpu_custom_call.1} parent=1 // pred_region
      %213 = dma.done [#allocation4], 128
    $region41: #{tpu_custom_call.1} parent=1 // pred_fallthru
      _
    %214 = vsyncpa [#allocation3], 1
    %215 = vsyncpa [#allocation6], 1
    %216 = vsyncpa [#allocation9], 1
    %217 = vsyncpa [#allocation4], 1

</llo_original>
